<compile_context>
chip_gen: v7x
topology: tpu7x:2x2x1
jax: 0.10.0
libtpu: 0.0.40
codegen_flags: <defaults>
</compile_context>

<pallas_src>
import functools

import jax
import jax.numpy as jnp
from jax.experimental import pallas as pl
from jax.experimental.pallas import tpu as pltpu


def _pad_to(n, m):
    return ((n + m - 1) // m) * m


def _cm_kernel(T, B, E, H, A_pad, off_wh, off_wd, off_wc,
               x_ref, h0_ref, w_ref, bias_ref, score_ref, hnew_ref):
    """Fused single-layer GRU step + Dense+ReLU + Classifier.

    x_ref    : [T*B, E]   bf16  time-major activations (batch rows padded)
    h0_ref   : [B, H]     f32   initial GRU state (aliased with hnew_ref)
    w_ref    : [R, L]     bf16  single packed weight slab
    bias_ref : [8, L]     f32   packed / folded biases
    score_ref: [B, A_pad] f32   lane-dense classifier scores
    hnew_ref : [B, H]     f32   new GRU state (written in place over h0)
    """
    H3 = 3 * H
    H3p = _pad_to(H3, 128)   # lane-aligned width for the gate matmuls

    # Static slices of the packed slabs (free at trace time).
    w_i = w_ref[0:E, :H3p]                    # [E, 3H(+pad)]  input->hidden (r|z|n)
    w_h = w_ref[off_wh:off_wh + H, :H3p]      # [H, 3H(+pad)]  hidden->hidden (r|z|n)
    w_d = w_ref[off_wd:off_wd + H, :64]       # [H, 64]        DenseLayer
    w_c = w_ref[off_wc:off_wc + 64, :A_pad]   # [64, A_pad]    Classifier

    b_i3 = bias_ref[0:1, :H3p]   # [b_ir+b_hr | b_iz+b_hz | b_in | 0...]
    b_h3 = bias_ref[1:2, :H3p]   # [0 | 0 | b_hn | 0...]
    b_d = bias_ref[2:3, :64]
    b_c = bias_ref[3:4, :A_pad]

    # Input projection is h-independent: one bf16 MXU matmul, f32 accumulate,
    # hoisted out of the recurrent loop.
    gi_all = jnp.dot(x_ref[...], w_i,
                     preferred_element_type=jnp.float32) + b_i3     # [T*B, H3p]

    h = h0_ref[...]                                                 # [B, H] f32
    # Single-layer GRU, PyTorch gate order (r, z, n).  The module requires
    # T == 1 (asserted in the wrapper), so a static unroll is free.
    # TODO(synk): for T > 1 switch to lax.fori_loop with pl.ds(t * B, B).
    for t in range(T):
        gi = gi_all[t * B:(t + 1) * B, :]
        gh = jnp.dot(h.astype(jnp.bfloat16), w_h,
                     preferred_element_type=jnp.float32) + b_h3     # [B, H3p]
        r = jax.nn.sigmoid(gi[:, 0:H] + gh[:, 0:H])
        z = jax.nn.sigmoid(gi[:, H:2 * H] + gh[:, H:2 * H])
        n = jnp.tanh(gi[:, 2 * H:H3] + r * gh[:, 2 * H:H3])
        h = (1.0 - z) * n + z * h

    hnew_ref[...] = h                                               # in-place (aliased)

    # DenseLayer + ReLU, then Classifier (lane-dense padded output width).
    h1 = jnp.maximum(
        jnp.dot(h.astype(jnp.bfloat16), w_d,
                preferred_element_type=jnp.float32) + b_d, 0.0)     # [B, 64] f32
    score_ref[...] = jnp.dot(h1.astype(jnp.bfloat16), w_c,
                             preferred_element_type=jnp.float32) + b_c


def pack_params(params):
    """Fuse the 6 GRU gate matrices, fold paired biases, and pack everything
    into ONE bf16 weight slab + ONE small f32 bias slab (2 weight operands)."""
    E, H = params["w_ir"].shape
    A = params["w_c"].shape[1]
    H3 = 3 * H

    L = max(128, _pad_to(H3, 128), _pad_to(A, 128))   # lane-dense slab width
    rE, rH = _pad_to(E, 16), _pad_to(H, 16)           # bf16 sublane-aligned rows
    off_wh = rE
    off_wd = rE + rH
    off_wc = rE + 2 * rH
    R = _pad_to(off_wc + 64, 16)

    w_i = jnp.concatenate([params["w_ir"], params["w_iz"], params["w_in"]], axis=1)
    w_h = jnp.concatenate([params["w_hr"], params["w_hz"], params["w_hn"]], axis=1)

    slab = jnp.zeros((R, L), jnp.float32)
    slab = slab.at[0:E, 0:H3].set(w_i)
    slab = slab.at[off_wh:off_wh + H, 0:H3].set(w_h)
    slab = slab.at[off_wd:off_wd + H, 0:64].set(params["w_d"])
    slab = slab.at[off_wc:off_wc + 64, 0:A].set(params["w_c"])

    # Folded biases: the r/z input/hidden bias pairs can be summed; b_hn must
    # stay inside the r * (...) term so it lives on its own row.
    b_i3 = jnp.concatenate([params["b_ir"] + params["b_hr"],
                            params["b_iz"] + params["b_hz"],
                            params["b_in"]], axis=1)                 # [1, 3H]
    b_h3 = jnp.concatenate([jnp.zeros((1, 2 * H), jnp.float32),
                            params["b_hn"]], axis=1)                 # [1, 3H]

    bias = jnp.zeros((8, L), jnp.float32)                            # sublane-aligned
    bias = bias.at[0:1, :H3].set(b_i3)
    bias = bias.at[1:2, :H3].set(b_h3)
    bias = bias.at[2:3, :64].set(params["b_d"])
    bias = bias.at[3:4, :A].set(params["b_c"])

    return slab.astype(jnp.bfloat16), bias


@functools.partial(jax.jit, static_argnames=("A",))
def cm_model_forward(rl_input, rl_state, w_slab, bias_slab, *, A):
    """Returns (stopScore [B, A] f32, isStop [B] int32, rl_new_state [1, B, H]).

    jit keeps the packed weight slabs device-resident across decode steps, so
    only rl_input / rl_state move per call.
    """
    assert rl_input.ndim == 3
    B, T, E = rl_input.shape
    H = rl_state.shape[-1]
    # The module's rl_output.reshape([B, H]) only works for max_word_num == 1.
    assert T == 1, "CM_Model.forward requires max_word_num == 1"

    A_pad = _pad_to(max(A, 1), 128)
    B_pad = max(8, _pad_to(B, 8))             # sublane-aligned batch rows
    rE, rH = _pad_to(E, 16), _pad_to(H, 16)
    off_wh, off_wd, off_wc = rE, rE + rH, rE + 2 * rH

    # Time-major bf16 activations, batch rows padded (halves the activation DMA).
    x = jnp.transpose(rl_input, (1, 0, 2)).astype(jnp.bfloat16)      # [T, B, E]
    x = jnp.zeros((T, B_pad, E), jnp.bfloat16).at[:, :B, :].set(x)
    x = x.reshape(T * B_pad, E)
    h0 = jnp.zeros((B_pad, H), jnp.float32).at[:B, :].set(
        rl_state.reshape(B, H).astype(jnp.float32))

    kernel = functools.partial(_cm_kernel, T, B_pad, E, H, A_pad,
                               off_wh, off_wd, off_wc)
    vmem = pl.BlockSpec(memory_space=pltpu.MemorySpace.VMEM)

    score_pad, hnew = pl.pallas_call(
        kernel,
        out_shape=(jax.ShapeDtypeStruct((B_pad, A_pad), jnp.float32),
                   jax.ShapeDtypeStruct((B_pad, H), jnp.float32)),
        in_specs=[vmem, vmem, vmem, vmem],
        out_specs=(vmem, vmem),
        # Write the new GRU state in place over h0 (no extra allocation or
        # HBM round-trip of the recurrent state each decode step).
        input_output_aliases={1: 1},
    )(x, h0, w_slab, bias_slab)

    score = score_pad[:B, :A]
    # argmax over A (=8) lanes is a trivial XLA op; doing it here drops the
    # 1-lane-wide in-kernel output and its masked store.
    # (torch.argmax returns int64; int32 is harmless for A < 2^31.)
    is_stop = jnp.argmax(score, axis=1)
    return score, is_stop, hnew[:B].reshape(1, B, H)


def init_params(key, E, H, A):
    """Deterministic synthetic parameters (PyTorch-style uniform init),
    stored transposed as [in_features, out_features]."""
    ks = jax.random.split(key, 16)

    def u(k, shape, scale):
        return jax.random.uniform(k, shape, jnp.float32, -scale, scale)

    s_gru = 1.0 / float(H) ** 0.5     # nn.GRU default: U(-1/sqrt(H), 1/sqrt(H))
    s_dense = 1.0 / float(H) ** 0.5   # nn.Linear(H, 64)
    s_cls = 1.0 / float(64) ** 0.5    # nn.Linear(64, A)

    return dict(
        # GRU input-to-hidden, [E, H] (transposed)
        w_ir=u(ks[0], (E, H), s_gru), w_iz=u(ks[1], (E, H), s_gru), w_in=u(ks[2], (E, H), s_gru),
        # GRU hidden-to-hidden, [H, H] (transposed)
        w_hr=u(ks[3], (H, H), s_gru), w_hz=u(ks[4], (H, H), s_gru), w_hn=u(ks[5], (H, H), s_gru),
        # GRU biases, [1, H] rows
        b_ir=u(ks[6], (1, H), s_gru), b_iz=u(ks[7], (1, H), s_gru), b_in=u(ks[8], (1, H), s_gru),
        b_hr=u(ks[9], (1, H), s_gru), b_hz=u(ks[10], (1, H), s_gru), b_hn=u(ks[11], (1, H), s_gru),
        # DenseLayer: Linear(H, 64)
        w_d=u(ks[12], (H, 64), s_dense), b_d=u(ks[13], (1, 64), s_dense),
        # Classifier: Linear(64, A)
        w_c=u(ks[14], (64, A), s_cls), b_c=u(ks[15], (1, A), s_cls),
    )


def _reference_forward(params, rl_input, rl_state):
    """Pure-JAX f32 reference of the PyTorch module (for a sanity check)."""
    B, T, _ = rl_input.shape
    H = params["w_hr"].shape[0]
    w_i = jnp.concatenate([params["w_ir"], params["w_iz"], params["w_in"]], 1)
    w_h = jnp.concatenate([params["w_hr"], params["w_hz"], params["w_hn"]], 1)
    b_i = jnp.concatenate([params["b_ir"], params["b_iz"], params["b_in"]], 1)
    b_h = jnp.concatenate([params["b_hr"], params["b_hz"], params["b_hn"]], 1)
    h = rl_state.reshape(B, H)
    for t in range(T):
        gi = rl_input[:, t, :] @ w_i + b_i
        gh = h @ w_h + b_h
        r = jax.nn.sigmoid(gi[:, :H] + gh[:, :H])
        z = jax.nn.sigmoid(gi[:, H:2 * H] + gh[:, H:2 * H])
        n = jnp.tanh(gi[:, 2 * H:] + r * gh[:, 2 * H:])
        h = (1.0 - z) * n + z * h
    h1 = jax.nn.relu(h @ params["w_d"] + params["b_d"])
    score = h1 @ params["w_c"] + params["b_c"]
    return score, h.reshape(1, B, H)


if __name__ == "__main__":
    # Small shapes: batch=2, seq(max_word_num)=1 (required by the module's
    # rl_output.reshape([B, H])), sentence_embedding_dim=16, hidden_dim=32,
    # action_num=8.
    B, T, E, H, A = 2, 1, 16, 32, 8

    key = jax.random.PRNGKey(0)
    k_in, k_st, k_par = jax.random.split(key, 3)

    rl_input = jax.random.normal(k_in, (B, T, E), jnp.float32)
    rl_state = jax.random.normal(k_st, (1, B, H), jnp.float32)
    raw_params = init_params(k_par, E, H, A)
    w_slab, bias_slab = pack_params(raw_params)     # one-time packing, device-resident

    stop_score, is_stop, rl_new_state = cm_model_forward(
        rl_input, rl_state, w_slab, bias_slab, A=A)
    jax.block_until_ready((stop_score, is_stop, rl_new_state))

    assert stop_score.shape == (B, A)
    assert is_stop.shape == (B,)
    assert rl_new_state.shape == (1, B, H)

    # Sanity check vs. an f32 pure-JAX reference (bf16 MXU operands -> loose tol).
    ref_score, ref_state = _reference_forward(raw_params, rl_input, rl_state)
    assert bool(jnp.allclose(stop_score, ref_score, atol=5e-2, rtol=5e-2))
    assert bool(jnp.allclose(rl_new_state, ref_state, atol=5e-2, rtol=5e-2))

    print("KERNEL_OK")
</pallas_src>

<mosaic_0001>
module attributes {stable_mosaic.version = 11 : i64} {
  func.func @_cm_kernel(%arg0: memref<8x16xbf16, #tpu.memory_space<vmem>>, %arg1: memref<8x32xf32, #tpu.memory_space<vmem>>, %arg2: memref<144x128xbf16, #tpu.memory_space<vmem>>, %arg3: memref<8x128xf32, #tpu.memory_space<vmem>>, %arg4: memref<8x128xf32, #tpu.memory_space<vmem>>, %arg5: memref<8x32xf32, #tpu.memory_space<vmem>>) attributes {dimension_semantics = [], scalar_prefetch = 0 : i64, scratch_operands = 0 : i64, tpu.core_type = #tpu.core_type<tc>} {
    %c0 = arith.constant 0 : index
    %c0_0 = arith.constant 0 : index
    %0 = vector.load %arg2[%c0, %c0_0] : memref<144x128xbf16, #tpu.memory_space<vmem>>, vector<16x128xbf16>
    %c16 = arith.constant 16 : index
    %c0_1 = arith.constant 0 : index
    %1 = vector.load %arg2[%c16, %c0_1] : memref<144x128xbf16, #tpu.memory_space<vmem>>, vector<32x128xbf16>
    %c48 = arith.constant 48 : index
    %c0_2 = arith.constant 0 : index
    %2 = vector.load %arg2[%c48, %c0_2] : memref<144x128xbf16, #tpu.memory_space<vmem>>, vector<32x64xbf16>
    %c80 = arith.constant 80 : index
    %c0_3 = arith.constant 0 : index
    %3 = vector.load %arg2[%c80, %c0_3] : memref<144x128xbf16, #tpu.memory_space<vmem>>, vector<64x128xbf16>
    %c0_4 = arith.constant 0 : index
    %c0_5 = arith.constant 0 : index
    %4 = vector.load %arg3[%c0_4, %c0_5] : memref<8x128xf32, #tpu.memory_space<vmem>>, vector<1x128xf32>
    %c1 = arith.constant 1 : index
    %c0_6 = arith.constant 0 : index
    %5 = vector.load %arg3[%c1, %c0_6] : memref<8x128xf32, #tpu.memory_space<vmem>>, vector<1x128xf32>
    %c2 = arith.constant 2 : index
    %c0_7 = arith.constant 0 : index
    %6 = vector.load %arg3[%c2, %c0_7] : memref<8x128xf32, #tpu.memory_space<vmem>>, vector<1x64xf32>
    %c3 = arith.constant 3 : index
    %c0_8 = arith.constant 0 : index
    %7 = vector.load %arg3[%c3, %c0_8] : memref<8x128xf32, #tpu.memory_space<vmem>>, vector<1x128xf32>
    %c0_9 = arith.constant 0 : index
    %c0_10 = arith.constant 0 : index
    %8 = vector.load %arg0[%c0_9, %c0_10] : memref<8x16xbf16, #tpu.memory_space<vmem>>, vector<8x16xbf16>
    %cst = arith.constant dense<0.000000e+00> : vector<8x128xf32>
    %9 = tpu.matmul %8, %0, %cst {dimension_numbers = #tpu.dot_dimension_numbers<[1], [0], [0], [1], [0, 0, 1, 1], [], []>} : vector<8x16xbf16>, vector<16x128xbf16>, vector<8x128xf32> -> vector<8x128xf32>
    %10 = vector.broadcast %4 : vector<1x128xf32> to vector<8x128xf32>
    %11 = arith.addf %9, %10 : vector<8x128xf32>
    %c0_11 = arith.constant 0 : index
    %c0_12 = arith.constant 0 : index
    %12 = vector.load %arg1[%c0_11, %c0_12] : memref<8x32xf32, #tpu.memory_space<vmem>>, vector<8x32xf32>
    %13 = arith.truncf %12 : vector<8x32xf32> to vector<8x32xbf16>
    %cst_13 = arith.constant dense<0.000000e+00> : vector<8x128xf32>
    %14 = tpu.matmul %13, %1, %cst_13 {dimension_numbers = #tpu.dot_dimension_numbers<[1], [0], [0], [1], [0, 0, 1, 1], [], []>} : vector<8x32xbf16>, vector<32x128xbf16>, vector<8x128xf32> -> vector<8x128xf32>
    %15 = vector.broadcast %5 : vector<1x128xf32> to vector<8x128xf32>
    %16 = arith.addf %14, %15 : vector<8x128xf32>
    %17 = vector.extract_strided_slice %11 {offsets = [0, 0], sizes = [8, 32], strides = [1, 1]} : vector<8x128xf32> to vector<8x32xf32>
    %18 = vector.extract_strided_slice %16 {offsets = [0, 0], sizes = [8, 32], strides = [1, 1]} : vector<8x128xf32> to vector<8x32xf32>
    %19 = arith.addf %17, %18 : vector<8x32xf32>
    %20 = arith.negf %19 : vector<8x32xf32>
    %21 = math.exp %20 : vector<8x32xf32>
    %cst_14 = arith.constant 1.000000e+00 : f32
    %22 = vector.broadcast %cst_14 : f32 to vector<8x32xf32>
    %23 = arith.addf %22, %21 : vector<8x32xf32>
    %24 = arith.divf %22, %23 : vector<8x32xf32>
    %25 = vector.extract_strided_slice %11 {offsets = [0, 32], sizes = [8, 32], strides = [1, 1]} : vector<8x128xf32> to vector<8x32xf32>
    %26 = vector.extract_strided_slice %16 {offsets = [0, 32], sizes = [8, 32], strides = [1, 1]} : vector<8x128xf32> to vector<8x32xf32>
    %27 = arith.addf %25, %26 : vector<8x32xf32>
    %28 = arith.negf %27 : vector<8x32xf32>
    %29 = math.exp %28 : vector<8x32xf32>
    %cst_15 = arith.constant 1.000000e+00 : f32
    %30 = vector.broadcast %cst_15 : f32 to vector<8x32xf32>
    %31 = arith.addf %30, %29 : vector<8x32xf32>
    %32 = arith.divf %30, %31 : vector<8x32xf32>
    %33 = vector.extract_strided_slice %11 {offsets = [0, 64], sizes = [8, 32], strides = [1, 1]} : vector<8x128xf32> to vector<8x32xf32>
    %34 = vector.extract_strided_slice %16 {offsets = [0, 64], sizes = [8, 32], strides = [1, 1]} : vector<8x128xf32> to vector<8x32xf32>
    %35 = arith.mulf %24, %34 : vector<8x32xf32>
    %36 = arith.addf %33, %35 : vector<8x32xf32>
    %37 = math.tanh %36 : vector<8x32xf32>
    %cst_16 = arith.constant 1.000000e+00 : f32
    %38 = vector.broadcast %cst_16 : f32 to vector<8x32xf32>
    %39 = arith.subf %38, %32 : vector<8x32xf32>
    %40 = arith.mulf %39, %37 : vector<8x32xf32>
    %41 = arith.mulf %32, %12 : vector<8x32xf32>
    %42 = arith.addf %40, %41 : vector<8x32xf32>
    %c0_17 = arith.constant 0 : index
    %c0_18 = arith.constant 0 : index
    %43 = vector.load %arg5[%c0_17, %c0_18] : memref<8x32xf32, #tpu.memory_space<vmem>>, vector<8x32xf32>
    tpu.vector_store %arg5[%c0_17, %c0_18], %42 {strides = array<i32>} : memref<8x32xf32, #tpu.memory_space<vmem>>, vector<8x32xf32>,
    %44 = arith.truncf %42 : vector<8x32xf32> to vector<8x32xbf16>
    %cst_19 = arith.constant dense<0.000000e+00> : vector<8x64xf32>
    %45 = tpu.matmul %44, %2, %cst_19 {dimension_numbers = #tpu.dot_dimension_numbers<[1], [0], [0], [1], [0, 0, 1, 1], [], []>} : vector<8x32xbf16>, vector<32x64xbf16>, vector<8x64xf32> -> vector<8x64xf32>
    %46 = vector.broadcast %6 : vector<1x64xf32> to vector<8x64xf32>
    %47 = arith.addf %45, %46 : vector<8x64xf32>
    %cst_20 = arith.constant 0.000000e+00 : f32
    %48 = vector.broadcast %cst_20 : f32 to vector<8x64xf32>
    %49 = arith.maximumf %47, %48 : vector<8x64xf32>
    %50 = arith.truncf %49 : vector<8x64xf32> to vector<8x64xbf16>
    %cst_21 = arith.constant dense<0.000000e+00> : vector<8x128xf32>
    %51 = tpu.matmul %50, %3, %cst_21 {dimension_numbers = #tpu.dot_dimension_numbers<[1], [0], [0], [1], [0, 0, 1, 1], [], []>} : vector<8x64xbf16>, vector<64x128xbf16>, vector<8x128xf32> -> vector<8x128xf32>
    %52 = vector.broadcast %7 : vector<1x128xf32> to vector<8x128xf32>
    %53 = arith.addf %51, %52 : vector<8x128xf32>
    %c0_22 = arith.constant 0 : index
    %c0_23 = arith.constant 0 : index
    %54 = vector.load %arg4[%c0_22, %c0_23] : memref<8x128xf32, #tpu.memory_space<vmem>>, vector<8x128xf32>
    tpu.vector_store %arg4[%c0_22, %c0_23], %53 {strides = array<i32>} : memref<8x128xf32, #tpu.memory_space<vmem>>, vector<8x128xf32>,
    return
  }
}

</mosaic_0001>

<llo_original>
// kernel: cm_model_forward.1
$region0: #{cm_model_forward.1}
  #allocation0 [shape = 'u32[]', space=smem, size = 0x4, offset = 0x4, fixed_abs, tag = 'smem constant byte address 0x4 - core index']
  #allocation1 [shape = 'u32[144,128]{1,0:T(1,128)}', space=vmem, size = 0x12000, scoped, tag = 'internal scratch']
  %s0 = inlined_call_operand.vmem [shape: bf16[8,16], index: 0, kind: input, shape index: {}]
  %s1 = inlined_call_operand.vmem [shape: f32[8,32], index: 1, kind: input, shape index: {}, may-alias: {1,5}]
  %s2 = inlined_call_operand.hbm [shape: bf16[144,128], index: 2, kind: input, shape index: {}]
  %s3 = inlined_call_operand.vmem [shape: f32[8,128], index: 3, kind: input, shape index: {}]
  %s4 = inlined_call_operand.vmem [shape: f32[8,128], index: 4, kind: output, shape index: {0}]
  %s5 = inlined_call_operand.vmem [shape: f32[8,32], index: 5, kind: output, shape index: {1}, may-alias: {1,5}]
  %6 = xla_tuple %s4, %s5
  %s7 = sld [smem:[#allocation0]]
  $region38: #{cm_model_forward.1} parent=0
    _
  %s9 = ssub.s32 1, %s7
  %s10 = scalar_select 0, %s9, %s7
  $region1: #{cm_model_forward.1} parent=0
    #allocation2 [shape = 'u8[36864]{0}', space=vmem, size = 0x9000, scoped, tag = 'input window, operand 2, single buffered']
    #allocation3 [shape = 's32[1]{0}', space=sflag, size = 0x4, scoped, tag = 'scoped memory for cm_model_forward.1']
    %11 = vsyncpa [#allocation3], 0
    // Predicated region
    $region2: #{cm_model_forward.1} parent=1 // pred_check
      _
    $region3: #{cm_model_forward.1} parent=1 // pred_check_branch
      %13 = sbr.rel (0) target = $region5
    $region4: #{cm_model_forward.1} parent=1 // pred_region
      _
    $region5: #{cm_model_forward.1} parent=1 // pred_fallthru
      _
    // Predicated region
    $region6: #{cm_model_forward.1} parent=1 // pred_check
      _
    $region7: #{cm_model_forward.1} parent=1 // pred_check_branch
      %15 = sbr.rel (0) target = $region9
    $region8: #{cm_model_forward.1} parent=1 // pred_region
      _
    $region9: #{cm_model_forward.1} parent=1 // pred_fallthru
      _
    // Predicated region
    $region10: #{cm_model_forward.1} parent=1 // pred_check
      _
    $region11: #{cm_model_forward.1} parent=1 // pred_check_branch
      %17 = sbr.rel (0) target = $region13
    $region12: #{cm_model_forward.1} parent=1 // pred_region
      %s19 = ssub.s32 1152, 1152
      %20 = vsyncadd [#allocation3], %s19
      %s21 = sshll.u32 [#allocation2], 4
      %s22 = int_to_ptr.vmem [resolvable:$true] %s21
      %27 = dma.hbm_to_vmem [thread:$0]  %s2, 1152, %s22, [#allocation3], 64, 64, 4
    $region13: #{cm_model_forward.1} parent=1 // pred_fallthru
      _
    // Predicated region
    $region14: #{cm_model_forward.1} parent=1 // pred_check
      _
    $region15: #{cm_model_forward.1} parent=1 // pred_check_branch
      %29 = sbr.rel (0) target = $region17
    $region16: #{cm_model_forward.1} parent=1 // pred_region
      _
    $region17: #{cm_model_forward.1} parent=1 // pred_fallthru
      _
    // Predicated region
    $region18: #{cm_model_forward.1} parent=1 // pred_check
      _
    $region19: #{cm_model_forward.1} parent=1 // pred_check_branch
      %31 = sbr.rel (0) target = $region21
    $region20: #{cm_model_forward.1} parent=1 // pred_region
      %32 = dma.done [#allocation3], 1152
    $region21: #{cm_model_forward.1} parent=1 // pred_fallthru
      _
    %v34 = vld [vmem:[#allocation2] sm:$0xf]
    %v35 = vld [vmem:[#allocation2 + $0x4] sm:$0xf]
    %v36 = vld [vmem:[#allocation2 + $0x8] sm:$0xf]
    %v37 = vld [vmem:[#allocation2 + $0xc] sm:$0xf]
    %v38 = vld [vmem:[#allocation2 + $0x10] sm:$0xf]
    %v39 = vld [vmem:[#allocation2 + $0x14] sm:$0xf]
    %v40 = vld [vmem:[#allocation2 + $0x18] sm:$0xf]
    %v41 = vld [vmem:[#allocation2 + $0x1c] sm:$0xf]
    %v42 = vld [vmem:[#allocation2 + $0x20] sm:$0xf]
    %v43 = vld [vmem:[#allocation2 + $0x24] sm:$0xf]
    %v44 = vld [vmem:[#allocation2 + $0x28] sm:$0xf]
    %v45 = vld [vmem:[#allocation2 + $0x2c] sm:$0xf]
    %v46 = vld [vmem:[#allocation2 + $0x30] sm:$0xf]
    %v47 = vld [vmem:[#allocation2 + $0x34] sm:$0xf]
    %v48 = vld [vmem:[#allocation2 + $0x38] sm:$0xf]
    %v49 = vld [vmem:[#allocation2 + $0x3c] sm:$0xf]
    %v50 = vld [vmem:[#allocation2 + $0x40] sm:$0xf]
    %v51 = vld [vmem:[#allocation2 + $0x44] sm:$0xf]
    %v52 = vld [vmem:[%s3] sm:$0x1]
    %v53 = vld [vmem:[%s3 + $0x1] sm:$0x1]
    %v54 = vld [vmem:[%s3 + $0x2] sm:$0x1]
    %v55 = vld [vmem:[%s3 + $0x3] sm:$0x1]
    %v56 = vld [vmem:[%s0] sm:$0xf]
    %v57 = vlaneseq
    %v58 = vshrl.u32 %v57, 7
    %v59 = vsub.s32 0, %v58
    %v60 = vrot.slane %v52, %v59
    %v63 = vunpack.c.l.b16 %v34
    %v64 = vunpack.c.l.b16 %v35
    %v65 = vpack.c.b16 %v64, %v63
    %vm67 = vcmask 130048
    %v69 = vsel %vm67, %v56, 0
    %71 = vmatprep.subr.bf16.mxu0 0
    %72 = vmatpush1.bf16.msra.mxu0 %v65
    %73 = vmatprep.subr.bf16.mxu0 0
    %74 = vmatpush1.bf16.msra.mxu0 0
    %75 = vmatprep.subr.bf16.mxu0 0
    %76 = vmatpush1.bf16.msra.mxu0 0
    %77 = vmatprep.subr.bf16.mxu0 0
    %78 = vmatpush1.bf16.msra.mxu0 0
    %79 = vmatprep.subr.bf16.mxu0 0
    %80 = vmatpush1.bf16.msra.mxu0 0
    %81 = vmatprep.subr.bf16.mxu0 0
    %82 = vmatpush1.bf16.msra.mxu0 0
    %83 = vmatprep.subr.bf16.mxu0 0
    %84 = vmatpush1.bf16.msra.mxu0 0
    %85 = vmatprep.subr.bf16.mxu0 0
    %86 = vmatpush1.bf16.msra.mxu0 0
    %87 = vmatprep.subr.bf16.mxu0 0
    %88 = vmatpush1.bf16.msra.mxu0 0
    %89 = vmatprep.subr.bf16.mxu0 0
    %90 = vmatpush1.bf16.msra.mxu0 0
    %91 = vmatprep.subr.bf16.mxu0 0
    %92 = vmatpush1.bf16.msra.mxu0 0
    %93 = vmatprep.subr.bf16.mxu0 0
    %94 = vmatpush1.bf16.msra.mxu0 0
    %95 = vmatprep.subr.bf16.mxu0 0
    %96 = vmatpush1.bf16.msra.mxu0 0
    %97 = vmatprep.subr.bf16.mxu0 0
    %98 = vmatpush1.bf16.msra.mxu0 0
    %99 = vmatprep.subr.bf16.mxu0 0
    %100 = vmatpush1.bf16.msra.mxu0 0
    %101 = vmatprep.subr.bf16.mxu0 0
    %102 = vmatpush1.bf16.msra.mxu0 0
    %103 = vmatprep.mubr.bf16.mxu0 0
    %104 = vmatmul.mubr.bf16.gmra.mrb[0].mxu0 %v69
    %v105 = vpop.f32.mrb[0].mxu0
    %v106 = vadd.f32 %v60, %v105
    %v107 = vpop.f32.mrb[0].mxu0
    %v108 = vpop.f32.mrb[0].mxu0
    %v109 = vpop.f32.mrb[0].mxu0
    %110 = vdwg.mxu0
    %v111 = vld [vmem:[%s1] sm:$0xff]
    %v112 = vpack.c.bf16 %v111, %v111
    %v113 = vlaneseq
    %v114 = vshrl.u32 %v113, 7
    %v115 = vsub.s32 0, %v114
    %v116 = vrot.slane %v53, %v115
    %v121 = vunpack.c.l.b16 %v36
    %v122 = vunpack.c.l.b16 %v37
    %v123 = vunpack.c.l.b16 %v38
    %v124 = vunpack.c.l.b16 %v39
    %v125 = vpack.c.b16 %v122, %v121
    %v126 = vpack.c.b16 %v124, %v123
    %vm129 = vcmask 261120
    %v131 = vsel %vm129, %v112, 0
    %133 = vmatprep.subr.bf16.mxu0 0
    %134 = vmatpush1.bf16.msra.mxu0 %v125
    %135 = vmatprep.subr.bf16.mxu0 0
    %136 = vmatpush1.bf16.msra.mxu0 %v126
    %137 = vmatprep.subr.bf16.mxu0 0
    %138 = vmatpush1.bf16.msra.mxu0 0
    %139 = vmatprep.subr.bf16.mxu0 0
    %140 = vmatpush1.bf16.msra.mxu0 0
    %141 = vmatprep.subr.bf16.mxu0 0
    %142 = vmatpush1.bf16.msra.mxu0 0
    %143 = vmatprep.subr.bf16.mxu0 0
    %144 = vmatpush1.bf16.msra.mxu0 0
    %145 = vmatprep.subr.bf16.mxu0 0
    %146 = vmatpush1.bf16.msra.mxu0 0
    %147 = vmatprep.subr.bf16.mxu0 0
    %148 = vmatpush1.bf16.msra.mxu0 0
    %149 = vmatprep.subr.bf16.mxu0 0
    %150 = vmatpush1.bf16.msra.mxu0 0
    %151 = vmatprep.subr.bf16.mxu0 0
    %152 = vmatpush1.bf16.msra.mxu0 0
    %153 = vmatprep.subr.bf16.mxu0 0
    %154 = vmatpush1.bf16.msra.mxu0 0
    %155 = vmatprep.subr.bf16.mxu0 0
    %156 = vmatpush1.bf16.msra.mxu0 0
    %157 = vmatprep.subr.bf16.mxu0 0
    %158 = vmatpush1.bf16.msra.mxu0 0
    %159 = vmatprep.subr.bf16.mxu0 0
    %160 = vmatpush1.bf16.msra.mxu0 0
    %161 = vmatprep.subr.bf16.mxu0 0
    %162 = vmatpush1.bf16.msra.mxu0 0
    %163 = vmatprep.subr.bf16.mxu0 0
    %164 = vmatpush1.bf16.msra.mxu0 0
    %165 = vmatprep.mubr.bf16.mxu0 0
    %166 = vmatmul.mubr.bf16.gmra.mrb[0].mxu0 %v131
    %v167 = vpop.f32.mrb[0].mxu0
    %v168 = vadd.f32 %v116, %v167
    %v169 = vpop.f32.mrb[0].mxu0
    %v170 = vpop.f32.mrb[0].mxu0
    %v171 = vpop.f32.mrb[0].mxu0
    %172 = vdwg.mxu0
    %v173 = vadd.f32 %v106, %v168
    %v174 = vxor.u32 %v173, 2147483648
    %v175 = vmul.f32 %v174, 1.442695
    %v176 = vpow.pop %v175
    %v177 = vadd.f32 %v176, 1.0
    %v178 = vrcp.pop %v177
    %v179 = vmul.f32 1.0, %v178
    %181 = vrot.lane.b32.xlu0 %v168, 64
    %v182 = vpop.permute.xlu0 %181
    %v184 = vmul.f32 %v179, %v182
    %186 = vrot.lane.b32.xlu0 %v184, 64
    %v187 = vpop.permute.xlu0 %186
    %v189 = vadd.f32 %v106, %v187
    %v190 = vtanh.pop %v189
    %v191 = vsub.f32 1.0, %v179
    %193 = vrot.lane.b32.xlu0 %v190, 96
    %v194 = vpop.permute.xlu0 %193
    %v196 = vmul.f32 %v191, %v194
    %198 = vrot.lane.b32.xlu0 %v111, 32
    %v199 = vpop.permute.xlu0 %198
    %v201 = vmul.f32 %v179, %v199
    %v202 = vadd.f32 %v196, %v201
    %204 = vrot.lane.b32.xlu0 %v202, 96
    %v205 = vpop.permute.xlu0 %204
    %207 = vst.msk [vmem:[%s5] sm:$0xff] %vm129, %v205
    %v208 = vpack.c.bf16 %v202, %v202
    %v209 = vlaneseq
    %v210 = vshrl.u32 %v209, 7
    %v211 = vsub.s32 0, %v210
    %v212 = vrot.slane %v54, %v211
    %214 = vrot.lane.b32.xlu0 %v208, 96
    %v215 = vpop.permute.xlu0 %214
    %v220 = vunpack.c.l.b16 %v40
    %v221 = vunpack.c.l.b16 %v41
    %v222 = vunpack.c.l.b16 %v42
    %v223 = vunpack.c.l.b16 %v43
    %v224 = vpack.c.b16 %v221, %v220
    %v225 = vpack.c.b16 %v223, %v222
    %v229 = vsel %vm129, %v215, 0
    %231 = vmatprep.subr.bf16.mxu0 0
    %232 = vmatpush1.bf16.msra.mxu0 %v224
    %233 = vmatprep.subr.bf16.mxu0 0
    %234 = vmatpush1.bf16.msra.mxu0 %v225
    %235 = vmatprep.subr.bf16.mxu0 0
    %236 = vmatpush1.bf16.msra.mxu0 0
    %237 = vmatprep.subr.bf16.mxu0 0
    %238 = vmatpush1.bf16.msra.mxu0 0
    %239 = vmatprep.subr.bf16.mxu0 0
    %240 = vmatpush1.bf16.msra.mxu0 0
    %241 = vmatprep.subr.bf16.mxu0 0
    %242 = vmatpush1.bf16.msra.mxu0 0
    %243 = vmatprep.subr.bf16.mxu0 0
    %244 = vmatpush1.bf16.msra.mxu0 0
    %245 = vmatprep.subr.bf16.mxu0 0
    %246 = vmatpush1.bf16.msra.mxu0 0
    %247 = vmatprep.subr.bf16.mxu0 0
    %248 = vmatpush1.bf16.msra.mxu0 0
    %249 = vmatprep.subr.bf16.mxu0 0
    %250 = vmatpush1.bf16.msra.mxu0 0
    %251 = vmatprep.subr.bf16.mxu0 0
    %252 = vmatpush1.bf16.msra.mxu0 0
    %253 = vmatprep.subr.bf16.mxu0 0
    %254 = vmatpush1.bf16.msra.mxu0 0
    %255 = vmatprep.subr.bf16.mxu0 0
    %256 = vmatpush1.bf16.msra.mxu0 0
    %257 = vmatprep.subr.bf16.mxu0 0
    %258 = vmatpush1.bf16.msra.mxu0 0
    %259 = vmatprep.subr.bf16.mxu0 0
    %260 = vmatpush1.bf16.msra.mxu0 0
    %261 = vmatprep.subr.bf16.mxu0 0
    %262 = vmatpush1.bf16.msra.mxu0 0
    %263 = vmatprep.mubr.bf16.mxu0 0
    %264 = vmatmul.mubr.bf16.gmra.mrb[0].mxu0 %v229
    %v265 = vpop.f32.mrb[0].mxu0
    %v266 = vadd.f32 %v212, %v265
    %v267 = vpop.f32.mrb[0].mxu0
    %v268 = vpop.f32.mrb[0].mxu0
    %v269 = vpop.f32.mrb[0].mxu0
    %270 = vdwg.mxu0
    %v271 = vmax.f32 %v266, 0.0
    %v272 = vpack.c.bf16 %v271, %v271
    %v273 = vlaneseq
    %v274 = vshrl.u32 %v273, 7
    %v275 = vsub.s32 0, %v274
    %v276 = vrot.slane %v55, %v275
    %v285 = vunpack.c.l.b16 %v44
    %v286 = vunpack.c.l.b16 %v45
    %v287 = vunpack.c.l.b16 %v46
    %v288 = vunpack.c.l.b16 %v47
    %v289 = vunpack.c.l.b16 %v48
    %v290 = vunpack.c.l.b16 %v49
    %v291 = vunpack.c.l.b16 %v50
    %v292 = vunpack.c.l.b16 %v51
    %v293 = vpack.c.b16 %v286, %v285
    %v294 = vpack.c.b16 %v288, %v287
    %v295 = vpack.c.b16 %v290, %v289
    %v296 = vpack.c.b16 %v292, %v291
    %vm301 = vcmask 523264
    %v303 = vsel %vm301, %v272, 0
    %305 = vmatprep.subr.bf16.mxu0 0
    %306 = vmatpush1.bf16.msra.mxu0 %v293
    %307 = vmatprep.subr.bf16.mxu0 0
    %308 = vmatpush1.bf16.msra.mxu0 %v294
    %309 = vmatprep.subr.bf16.mxu0 0
    %310 = vmatpush1.bf16.msra.mxu0 %v295
    %311 = vmatprep.subr.bf16.mxu0 0
    %312 = vmatpush1.bf16.msra.mxu0 %v296
    %313 = vmatprep.subr.bf16.mxu0 0
    %314 = vmatpush1.bf16.msra.mxu0 0
    %315 = vmatprep.subr.bf16.mxu0 0
    %316 = vmatpush1.bf16.msra.mxu0 0
    %317 = vmatprep.subr.bf16.mxu0 0
    %318 = vmatpush1.bf16.msra.mxu0 0
    %319 = vmatprep.subr.bf16.mxu0 0
    %320 = vmatpush1.bf16.msra.mxu0 0
    %321 = vmatprep.subr.bf16.mxu0 0
    %322 = vmatpush1.bf16.msra.mxu0 0
    %323 = vmatprep.subr.bf16.mxu0 0
    %324 = vmatpush1.bf16.msra.mxu0 0
    %325 = vmatprep.subr.bf16.mxu0 0
    %326 = vmatpush1.bf16.msra.mxu0 0
    %327 = vmatprep.subr.bf16.mxu0 0
    %328 = vmatpush1.bf16.msra.mxu0 0
    %329 = vmatprep.subr.bf16.mxu0 0
    %330 = vmatpush1.bf16.msra.mxu0 0
    %331 = vmatprep.subr.bf16.mxu0 0
    %332 = vmatpush1.bf16.msra.mxu0 0
    %333 = vmatprep.subr.bf16.mxu0 0
    %334 = vmatpush1.bf16.msra.mxu0 0
    %335 = vmatprep.subr.bf16.mxu0 0
    %336 = vmatpush1.bf16.msra.mxu0 0
    %337 = vmatprep.mubr.bf16.mxu0 0
    %338 = vmatmul.mubr.bf16.gmra.mrb[0].mxu0 %v303
    %v339 = vpop.f32.mrb[0].mxu0
    %v340 = vadd.f32 %v276, %v339
    %v341 = vpop.f32.mrb[0].mxu0
    %v342 = vpop.f32.mrb[0].mxu0
    %v343 = vpop.f32.mrb[0].mxu0
    %344 = vdwg.mxu0
    %345 = vst [vmem:[%s4] sm:$0xff] %v340
    // Predicated region
    $region22: #{cm_model_forward.1} parent=1 // pred_check
      _
    $region23: #{cm_model_forward.1} parent=1 // pred_check_branch
      %347 = sbr.rel (0) target = $region25
    $region24: #{cm_model_forward.1} parent=1 // pred_region
      _
    $region25: #{cm_model_forward.1} parent=1 // pred_fallthru
      _
    // Predicated region
    $region26: #{cm_model_forward.1} parent=1 // pred_check
      _
    $region27: #{cm_model_forward.1} parent=1 // pred_check_branch
      %349 = sbr.rel (0) target = $region29
    $region28: #{cm_model_forward.1} parent=1 // pred_region
      _
    $region29: #{cm_model_forward.1} parent=1 // pred_fallthru
      _
    // Predicated region
    $region30: #{cm_model_forward.1} parent=1 // pred_check
      _
    $region31: #{cm_model_forward.1} parent=1 // pred_check_branch
      %351 = sbr.rel (0) target = $region33
    $region32: #{cm_model_forward.1} parent=1 // pred_region
      _
    $region33: #{cm_model_forward.1} parent=1 // pred_fallthru
      _
    // Predicated region
    $region34: #{cm_model_forward.1} parent=1 // pred_check
      _
    $region35: #{cm_model_forward.1} parent=1 // pred_check_branch
      %353 = sbr.rel (0) target = $region37
    $region36: #{cm_model_forward.1} parent=1 // pred_region
      _
    $region37: #{cm_model_forward.1} parent=1 // pred_fallthru
      _
    %354 = vsyncpa [#allocation3], 1

</llo_original>
